<compile_context>
chip_gen: v7x
topology: tpu7x:2x2x1
jax: 0.10.0
libtpu: 0.0.40
codegen_flags: <defaults>
</compile_context>

<pallas_src>
import jax
import jax.numpy as jnp
from jax import lax
from jax.experimental import pallas as pl
from jax.experimental.pallas import tpu as pltpu

_LANE = 128
_TWO_PI = 6.283185307179586


def _hash_u32(x, seed):
    # lowbias32-style mixer: (counter, seed) -> 32 well-mixed random bits.
    x = x * jnp.uint32(0x9E3779B9) + seed
    x = x ^ (x >> jnp.uint32(16))
    x = x * jnp.uint32(0x7FEB352D)
    x = x ^ (x >> jnp.uint32(15))
    x = x * jnp.uint32(0x846CA68B)
    x = x ^ (x >> jnp.uint32(16))
    return x


def _bits_to_unit(bits):
    # 23 random mantissa bits with exponent of 1.0 -> float32 in [1, 2).
    return lax.bitcast_convert_type(
        (bits >> jnp.uint32(9)) | jnp.uint32(0x3F800000), jnp.float32
    )


def _awgn_kernel(seed_ref, std_ref, x_ref, o_ref):
    """One grid step = one (batch, tile) block.

    seed_ref : SMEM int32[1]           (scalar prefetch)
    std_ref  : SMEM float32[B]         (scalar prefetch, per-batch noise std)
    x_ref    : VMEM x.dtype[tr, 128]   (batch dim squeezed)
    o_ref    : VMEM x.dtype[tr, 128]
    """
    b = pl.program_id(0)
    t = pl.program_id(1)
    n_tiles = pl.num_programs(1)

    std = std_ref[b]                       # per-batch noise std (f32 scalar)
    seed = seed_ref[0].astype(jnp.uint32)

    tr, lanes = x_ref.shape
    hr = tr // 2
    tile_elems = tr * lanes

    # Unique 32-bit counter per element of the (padded) tensor -> noise is
    # independent across batches AND tiles (and reproducible for a given seed).
    base = ((b * n_tiles + t) * tile_elems).astype(jnp.uint32)
    row = lax.broadcasted_iota(jnp.int32, (hr, lanes), 0)
    col = lax.broadcasted_iota(jnp.int32, (hr, lanes), 1)
    lin = (row * lanes + col).astype(jnp.uint32)

    bits1 = _hash_u32(base + lin, seed)
    bits2 = _hash_u32(base + jnp.uint32(hr * lanes) + lin, seed)

    u1 = 2.0 - _bits_to_unit(bits1)                            # (0, 1]
    theta = (_bits_to_unit(bits2) - 1.0) * jnp.float32(_TWO_PI)  # [0, 2pi)

    # Box-Muller, both outputs used: one transcendental set per output PAIR.
    r = jnp.sqrt(-2.0 * jnp.log(u1)) * std
    z_top = r * jnp.cos(theta)
    z_bot = r * jnp.sin(theta)

    o_ref[0:hr, :] = (x_ref[0:hr, :] + z_top).astype(o_ref.dtype)
    o_ref[hr:tr, :] = (x_ref[hr:tr, :] + z_bot).astype(o_ref.dtype)


def complex_awgn_channel(x, snr, seed=0, tile_rows=2048):
    """x: [B, C, H, W], snr: [B, S] -> x + AWGN, std = sqrt(0.5*10^(-snr[:,-1]/10))."""
    B, C, H, W = x.shape
    L = C * H * W

    rows = pl.cdiv(L, _LANE)
    # Tile rows: multiple of 16 so each Box-Muller half is sublane(8)-aligned,
    # capped at ~1 MiB f32 per tile (VMEM-safe with double buffering on v7x).
    tr = min(tile_rows, ((rows + 15) // 16) * 16)
    rows_padded = pl.cdiv(rows, tr) * tr
    Lp = rows_padded * _LANE
    n_tiles = rows_padded // tr

    xf = x.reshape(B, L)
    if Lp != L:
        xf = jnp.pad(xf, ((0, 0), (0, Lp - L)))
    x3 = xf.reshape(B, rows_padded, _LANE)

    # Precompute per-batch noise std in the wrapper (removes scalar pow/sqrt
    # from the kernel critical path).
    snr_last = snr[:, -1].astype(jnp.float32)
    std = jnp.sqrt(0.5 * jnp.power(jnp.float32(10.0), -snr_last / 10.0))
    seed_arr = jnp.asarray([seed], dtype=jnp.int32)

    out3 = pl.pallas_call(
        _awgn_kernel,
        out_shape=jax.ShapeDtypeStruct((B, rows_padded, _LANE), x.dtype),
        grid_spec=pltpu.PrefetchScalarGridSpec(
            num_scalar_prefetch=2,          # seed, std -> SMEM
            grid=(B, n_tiles),
            in_specs=[
                pl.BlockSpec((None, tr, _LANE),
                             lambda b, t, seed_r, std_r: (b, t, 0)),
            ],
            out_specs=pl.BlockSpec((None, tr, _LANE),
                                   lambda b, t, seed_r, std_r: (b, t, 0)),
        ),
        compiler_params=pltpu.CompilerParams(
            dimension_semantics=("parallel", "parallel"),
        ),
    )(seed_arr, std, x3)

    out = out3.reshape(B, Lp)[:, :L]
    return out.reshape(B, C, H, W)


if __name__ == "__main__":
    key = jax.random.PRNGKey(0)
    kx, ks = jax.random.split(key)

    B, C, H, W, S = 2, 4, 16, 16, 3
    x = jax.random.normal(kx, (B, C, H, W), dtype=jnp.float32)
    # SNR values (dB); only snr[:, -1] is used by the channel.
    snr = jax.random.uniform(ks, (B, S), dtype=jnp.float32, minval=0.0, maxval=20.0)

    y = complex_awgn_channel(x, snr, seed=0)
    y = jax.block_until_ready(y)

    assert y.shape == x.shape and y.dtype == x.dtype
    assert bool(jnp.all(jnp.isfinite(y)))

    # Sanity: per-batch empirical noise std should track the target std.
    std_target = jnp.sqrt(0.5 * 10.0 ** (-snr[:, -1] / 10.0))
    noise = (y - x).reshape(B, -1)
    std_emp = jnp.std(noise, axis=1)
    assert bool(jnp.all(jnp.abs(std_emp - std_target) < 0.25 * std_target + 1e-3))

    print("KERNEL_OK")
</pallas_src>

<mosaic_0001>
module attributes {stable_mosaic.version = 11 : i64} {
  func.func @_awgn_kernel(%arg0: i32, %arg1: i32, %arg2: memref<1xi32, #tpu.memory_space<smem>>, %arg3: memref<2xf32, #tpu.memory_space<smem>>, %arg4: memref<1x16x128xf32, #tpu.memory_space<vmem>>, %arg5: memref<1x16x128xf32, #tpu.memory_space<vmem>>) attributes {dimension_semantics = [#tpu.dimension_semantics<parallel>, #tpu.dimension_semantics<parallel>], iteration_bounds = array<i64: 2, 1>, scalar_prefetch = 2 : i64, scratch_operands = 0 : i64, tpu.core_type = #tpu.core_type<tc>, window_params = [{transform_indices = @transform_0, window_bounds = array<i64: 1, 16, 128>}, {transform_indices = @transform_1, window_bounds = array<i64: 1, 16, 128>}]} {
    %0 = arith.index_cast %arg0 : i32 to index
    %1 = memref.load %arg3[%0] : memref<2xf32, #tpu.memory_space<smem>>
    %c0 = arith.constant 0 : index
    %2 = memref.load %arg2[%c0] : memref<1xi32, #tpu.memory_space<smem>>
    %c1_i32 = arith.constant 1 : i32
    %3 = arith.muli %arg0, %c1_i32 : i32
    %4 = arith.addi %3, %arg1 : i32
    %c2048_i32 = arith.constant 2048 : i32
    %5 = arith.muli %4, %c2048_i32 : i32
    %6 = tpu.iota {dimensions = array<i32: 0>} : vector<8x128xi32>
    %7 = tpu.iota {dimensions = array<i32: 1>} : vector<8x128xi32>
    %c128_i32 = arith.constant 128 : i32
    %8 = vector.broadcast %c128_i32 : i32 to vector<8x128xi32>
    %9 = arith.muli %6, %8 : vector<8x128xi32>
    %10 = arith.addi %9, %7 : vector<8x128xi32>
    %11 = vector.broadcast %5 : i32 to vector<8x128xi32>
    %12 = arith.addi %11, %10 : vector<8x128xi32>
    %c-1640531527_i32 = arith.constant -1640531527 : i32
    %13 = vector.broadcast %c-1640531527_i32 : i32 to vector<8x128xi32>
    %14 = arith.muli %12, %13 : vector<8x128xi32>
    %15 = vector.broadcast %2 : i32 to vector<8x128xi32>
    %16 = arith.addi %14, %15 : vector<8x128xi32>
    %c16_i32 = arith.constant 16 : i32
    %17 = vector.broadcast %c16_i32 : i32 to vector<8x128xi32>
    %18 = arith.shrui %16, %17 : vector<8x128xi32>
    %19 = arith.xori %16, %18 : vector<8x128xi32>
    %c2146121005_i32 = arith.constant 2146121005 : i32
    %20 = vector.broadcast %c2146121005_i32 : i32 to vector<8x128xi32>
    %21 = arith.muli %19, %20 : vector<8x128xi32>
    %c15_i32 = arith.constant 15 : i32
    %22 = vector.broadcast %c15_i32 : i32 to vector<8x128xi32>
    %23 = arith.shrui %21, %22 : vector<8x128xi32>
    %24 = arith.xori %21, %23 : vector<8x128xi32>
    %c-2073254261_i32 = arith.constant -2073254261 : i32
    %25 = vector.broadcast %c-2073254261_i32 : i32 to vector<8x128xi32>
    %26 = arith.muli %24, %25 : vector<8x128xi32>
    %c16_i32_0 = arith.constant 16 : i32
    %27 = vector.broadcast %c16_i32_0 : i32 to vector<8x128xi32>
    %28 = arith.shrui %26, %27 : vector<8x128xi32>
    %29 = arith.xori %26, %28 : vector<8x128xi32>
    %c1024_i32 = arith.constant 1024 : i32
    %30 = arith.addi %5, %c1024_i32 : i32
    %31 = vector.broadcast %30 : i32 to vector<8x128xi32>
    %32 = arith.addi %31, %10 : vector<8x128xi32>
    %c-1640531527_i32_1 = arith.constant -1640531527 : i32
    %33 = vector.broadcast %c-1640531527_i32_1 : i32 to vector<8x128xi32>
    %34 = arith.muli %32, %33 : vector<8x128xi32>
    %35 = vector.broadcast %2 : i32 to vector<8x128xi32>
    %36 = arith.addi %34, %35 : vector<8x128xi32>
    %c16_i32_2 = arith.constant 16 : i32
    %37 = vector.broadcast %c16_i32_2 : i32 to vector<8x128xi32>
    %38 = arith.shrui %36, %37 : vector<8x128xi32>
    %39 = arith.xori %36, %38 : vector<8x128xi32>
    %c2146121005_i32_3 = arith.constant 2146121005 : i32
    %40 = vector.broadcast %c2146121005_i32_3 : i32 to vector<8x128xi32>
    %41 = arith.muli %39, %40 : vector<8x128xi32>
    %c15_i32_4 = arith.constant 15 : i32
    %42 = vector.broadcast %c15_i32_4 : i32 to vector<8x128xi32>
    %43 = arith.shrui %41, %42 : vector<8x128xi32>
    %44 = arith.xori %41, %43 : vector<8x128xi32>
    %c-2073254261_i32_5 = arith.constant -2073254261 : i32
    %45 = vector.broadcast %c-2073254261_i32_5 : i32 to vector<8x128xi32>
    %46 = arith.muli %44, %45 : vector<8x128xi32>
    %c16_i32_6 = arith.constant 16 : i32
    %47 = vector.broadcast %c16_i32_6 : i32 to vector<8x128xi32>
    %48 = arith.shrui %46, %47 : vector<8x128xi32>
    %49 = arith.xori %46, %48 : vector<8x128xi32>
    %c9_i32 = arith.constant 9 : i32
    %50 = vector.broadcast %c9_i32 : i32 to vector<8x128xi32>
    %51 = arith.shrui %29, %50 : vector<8x128xi32>
    %c1065353216_i32 = arith.constant 1065353216 : i32
    %52 = vector.broadcast %c1065353216_i32 : i32 to vector<8x128xi32>
    %53 = arith.ori %51, %52 : vector<8x128xi32>
    %54 = tpu.bitcast %53 : vector<8x128xi32> -> vector<8x128xf32>
    %cst = arith.constant 2.000000e+00 : f32
    %55 = vector.broadcast %cst : f32 to vector<8x128xf32>
    %56 = arith.subf %55, %54 : vector<8x128xf32>
    %c9_i32_7 = arith.constant 9 : i32
    %57 = vector.broadcast %c9_i32_7 : i32 to vector<8x128xi32>
    %58 = arith.shrui %49, %57 : vector<8x128xi32>
    %c1065353216_i32_8 = arith.constant 1065353216 : i32
    %59 = vector.broadcast %c1065353216_i32_8 : i32 to vector<8x128xi32>
    %60 = arith.ori %58, %59 : vector<8x128xi32>
    %61 = tpu.bitcast %60 : vector<8x128xi32> -> vector<8x128xf32>
    %cst_9 = arith.constant 1.000000e+00 : f32
    %62 = vector.broadcast %cst_9 : f32 to vector<8x128xf32>
    %63 = arith.subf %61, %62 : vector<8x128xf32>
    %cst_10 = arith.constant 6.28318548 : f32
    %64 = vector.broadcast %cst_10 : f32 to vector<8x128xf32>
    %65 = arith.mulf %63, %64 : vector<8x128xf32>
    %66 = math.log %56 : vector<8x128xf32>
    %cst_11 = arith.constant -2.000000e+00 : f32
    %67 = vector.broadcast %cst_11 : f32 to vector<8x128xf32>
    %68 = arith.mulf %67, %66 : vector<8x128xf32>
    %69 = math.sqrt %68 : vector<8x128xf32>
    %70 = vector.broadcast %1 : f32 to vector<8x128xf32>
    %71 = arith.mulf %69, %70 : vector<8x128xf32>
    %72 = math.cos %65 : vector<8x128xf32>
    %73 = arith.mulf %71, %72 : vector<8x128xf32>
    %74 = math.sin %65 : vector<8x128xf32>
    %75 = arith.mulf %71, %74 : vector<8x128xf32>
    %c0_12 = arith.constant 0 : index
    %c0_13 = arith.constant 0 : index
    %c0_14 = arith.constant 0 : index
    %76 = vector.load %arg4[%c0_12, %c0_13, %c0_14] : memref<1x16x128xf32, #tpu.memory_space<vmem>>, vector<1x8x128xf32>
    %77 = vector.shape_cast %76 : vector<1x8x128xf32> to vector<8x128xf32>
    %78 = arith.addf %77, %73 : vector<8x128xf32>
    %c0_15 = arith.constant 0 : index
    %c0_16 = arith.constant 0 : index
    %c0_17 = arith.constant 0 : index
    %79 = vector.load %arg5[%c0_15, %c0_16, %c0_17] : memref<1x16x128xf32, #tpu.memory_space<vmem>>, vector<1x8x128xf32>
    %80 = vector.shape_cast %79 : vector<1x8x128xf32> to vector<8x128xf32>
    %81 = vector.shape_cast %78 : vector<8x128xf32> to vector<1x8x128xf32>
    tpu.vector_store %arg5[%c0_15, %c0_16, %c0_17], %81 {strides = array<i32>} : memref<1x16x128xf32, #tpu.memory_space<vmem>>, vector<1x8x128xf32>,
    %c0_18 = arith.constant 0 : index
    %c8 = arith.constant 8 : index
    %c0_19 = arith.constant 0 : index
    %82 = vector.load %arg4[%c0_18, %c8, %c0_19] : memref<1x16x128xf32, #tpu.memory_space<vmem>>, vector<1x8x128xf32>
    %83 = vector.shape_cast %82 : vector<1x8x128xf32> to vector<8x128xf32>
    %84 = arith.addf %83, %75 : vector<8x128xf32>
    %c0_20 = arith.constant 0 : index
    %c8_21 = arith.constant 8 : index
    %c0_22 = arith.constant 0 : index
    %85 = vector.load %arg5[%c0_20, %c8_21, %c0_22] : memref<1x16x128xf32, #tpu.memory_space<vmem>>, vector<1x8x128xf32>
    %86 = vector.shape_cast %85 : vector<1x8x128xf32> to vector<8x128xf32>
    %87 = vector.shape_cast %84 : vector<8x128xf32> to vector<1x8x128xf32>
    tpu.vector_store %arg5[%c0_20, %c8_21, %c0_22], %87 {strides = array<i32>} : memref<1x16x128xf32, #tpu.memory_space<vmem>>, vector<1x8x128xf32>,
    return
  }
  func.func @transform_0(%arg0: i32, %arg1: i32, %arg2: memref<1xi32, #tpu.memory_space<smem>>, %arg3: memref<2xf32, #tpu.memory_space<smem>>) -> (i32, i32, i32) {
    %c0_i32 = arith.constant 0 : i32
    %c0_i32_0 = arith.constant 0 : i32
    return %arg0, %arg1, %c0_i32 : i32, i32, i32
  }
  func.func @transform_1(%arg0: i32, %arg1: i32, %arg2: memref<1xi32, #tpu.memory_space<smem>>, %arg3: memref<2xf32, #tpu.memory_space<smem>>) -> (i32, i32, i32) {
    %c0_i32 = arith.constant 0 : i32
    %c0_i32_0 = arith.constant 0 : i32
    return %arg0, %arg1, %c0_i32 : i32, i32, i32
  }
}

</mosaic_0001>

<llo_original>
// kernel: tpu_custom_call.1
$region0: #{tpu_custom_call.1}
  #allocation0 [shape = 'u32[]', space=smem, size = 0x4, offset = 0x4, fixed_abs, tag = 'smem constant byte address 0x4 - core index']
  #allocation1 [shape = 'u32[144,128]{1,0:T(1,128)}', space=vmem, size = 0x12000, scoped, tag = 'internal scratch']
  #allocation2 [shape = 's32[1]{0}', space=sflag, size = 0x4, scoped, tag = 'scoped memory for tpu_custom_call.1']
  #allocation3 [shape = 's32[1]{0:T(128)S(6)}', space=smem, size = 0x200, scoped, tag = 'prefetched SMEM operand 0']
  #allocation4 [shape = 'u8[512]{0}', space=smem, size = 0x200, scoped, tag = 'prefetched SMEM operand 1']
  %s0 = inlined_call_operand.<no memory space> [shape: s32[1], index: 0, kind: input, shape index: {}]
  %s1 = inlined_call_operand.vmem [shape: f32[2], index: 1, kind: input, shape index: {}]
  %s2 = inlined_call_operand.hbm [shape: f32[2,16,128], index: 2, kind: input, shape index: {}]
  %s3 = inlined_call_operand.hbm [shape: f32[2,16,128], index: 3, kind: output, shape index: {}]
  %s4 = sld [smem:[#allocation0]]
  $region41: #{tpu_custom_call.1} parent=0
    _
  %s6 = ssub.s32 1, %s4
  %s7 = scalar_select 0, %s6, %s4
  %8 = sst [smem:[#allocation3]] %s0
  %s9 = sshll.u32 %s1, 4
  %s10 = int_to_ptr.vmem [resolvable:$true] %s9
  %12 = dma.vmem_to_smem %s10, 16, [#allocation4], [#allocation2]
  %13 = dma.done [#allocation2], 16
  %14 = sfence
  $region1: #{tpu_custom_call.1} parent=0
    #allocation5 [shape = 'u8[16384]{0}', space=vmem, size = 0x4000, scoped, tag = 'input window, operand 2']
    #allocation6 [shape = 's32[2]{0}', space=sflag, size = 0x8, scoped, tag = 'scoped memory for tpu_custom_call.1']
    #allocation7 [shape = 's32[2]{0}', space=sflag, size = 0x8, scoped, tag = 'scoped memory for tpu_custom_call.1']
    #allocation8 [shape = 'u8[16384]{0}', space=vmem, size = 0x4000, scoped, tag = 'output window, operand 0']
    %15 = vsyncpa [#allocation6], 0
    %s16 = scalar_lea.sflag [#allocation6], 1
    %17 = vsyncpa %s16, 0
    %18 = vsyncpa [#allocation7], 0
    %s19 = scalar_lea.sflag [#allocation7], 1
    %20 = vsyncpa %s19, 0
    loop: start=0, step=1, limit=4
    $region2: #{tpu_custom_call.1} parent=1 // loop_pre_header
      _
    $region3: #{tpu_custom_call.1} parent=1 // loop_header
      %s22 = sphi 0, %s26
      %p23 = scmp.ge.s32.totalorder %s22, 4
      %s29 = sphi 0, %s41
      %s30 = sphi 0, %s37
      %s31 = sphi 0, %s29
      %s32 = sphi 0, %s30
      %s33 = sphi 0, %s31
      %s34 = sphi 0, %s32
      %s46 = sphi 0, %s48
      %s49 = sphi 0, %s46
      %s50 = sphi 0, %s49
      %s66 = sphi 0, %s50
      %s74 = sphi 0, %s76
      %s77 = sphi 0, %s74
      %s78 = sphi 0, %s77
      %s94 = sphi 0, %s78
    $region4: #{tpu_custom_call.1} parent=1 // loop_header_branch
      %25 = sbr.rel (%p23) target = $region8
    $region5: #{tpu_custom_call.1} parent=1 // loop_body
      %s27 = ssub.s32 %s22, 1
      %s28 = ssub.s32 %s22, 2
      %s35 = sadd.s32 1, %s30
      %p36 = scmp.ge.s32.totalorder %s35, 1
      %s37 = scalar_select %p36, 0, %s35
      %s38 = sadd.s32 1, %s29
      %s39 = scalar_select %p36, %s38, %s29
      %p40 = scmp.ge.s32.totalorder %s39, 2
      %s41 = scalar_select %p40, 0, %s39
      %s42 = ssub.s32 %s29, %s41
      %s43 = ssub.s32 %s30, %s37
      %s44 = sor.u32 %s42, %s43
      %p45 = scmp.eq.s32.totalorder %s44, 0
      %s47 = sadd.s32 %s46, 1
      %s48 = scalar_select %p45, %s46, %s47
      %p51 = pneg %p45
      %p52 = scmp.eq.s32.totalorder %s22, 1
      %p53 = por %p51, %p52
      %p54 = scmp.ne.s32.totalorder %s46, %s49
      %p55 = scmp.eq.s32.totalorder %s22, 0
      %p56 = por %p54, %p55
      %p57 = scmp.ne.s32.totalorder %s46, %s49
      %p58 = scmp.eq.s32.totalorder %s27, 1
      %p59 = por %p57, %p58
      %p60 = scmp.ne.s32.totalorder %s49, %s50
      %p61 = scmp.eq.s32.totalorder %s27, 0
      %p62 = por %p60, %p61
      %p63 = scmp.ne.s32.totalorder %s49, %s50
      %p64 = scmp.eq.s32.totalorder %s28, 1
      %p65 = por %p63, %p64
      %p67 = scmp.ne.s32.totalorder %s50, %s66
      %p68 = scmp.eq.s32.totalorder %s28, 0
      %p69 = por %p67, %p68
      %s70 = ssub.s32 %s29, %s41
      %s71 = ssub.s32 %s30, %s37
      %s72 = sor.u32 %s70, %s71
      %p73 = scmp.eq.s32.totalorder %s72, 0
      %s75 = sadd.s32 %s74, 1
      %s76 = scalar_select %p73, %s74, %s75
      %p79 = pneg %p73
      %p80 = scmp.eq.s32.totalorder %s22, 1
      %p81 = por %p79, %p80
      %p82 = scmp.ne.s32.totalorder %s74, %s77
      %p83 = scmp.eq.s32.totalorder %s22, 0
      %p84 = por %p82, %p83
      %p85 = scmp.ne.s32.totalorder %s74, %s77
      %p86 = scmp.eq.s32.totalorder %s27, 1
      %p87 = por %p85, %p86
      %p88 = scmp.ne.s32.totalorder %s77, %s78
      %p89 = scmp.eq.s32.totalorder %s27, 0
      %p90 = por %p88, %p89
      %p91 = scmp.ne.s32.totalorder %s77, %s78
      %p92 = scmp.eq.s32.totalorder %s28, 1
      %p93 = por %p91, %p92
      %p95 = scmp.ne.s32.totalorder %s78, %s94
      %p96 = scmp.eq.s32.totalorder %s28, 0
      %p97 = por %p95, %p96
      %p98 = scmp.le.s32.totalorder 1, %s22
      %p99 = scmp.lt.s32.totalorder %s22, 3
      %p100 = pnand %p98, %p99
      %p101 = pneg %p100
      // Predicated region
      $region9: #{tpu_custom_call.1} parent=5 // pred_check
        _
      $region10: #{tpu_custom_call.1} parent=5 // pred_check_branch
        %103 = sbr.rel (%p100) target = $region12
      $region11: #{tpu_custom_call.1} parent=5 // pred_region
        %s104 = ssub.s32 %s22, 1
      $region12: #{tpu_custom_call.1} parent=5 // pred_fallthru
        _
      %p105 = scmp.lt.s32.totalorder %s22, 2
      // Predicated region
      $region13: #{tpu_custom_call.1} parent=5 // pred_check
        %p106 = pneg %p105
      $region14: #{tpu_custom_call.1} parent=5 // pred_check_branch
        %108 = sbr.rel (%p106) target = $region16
      $region15: #{tpu_custom_call.1} parent=5 // pred_region
        // Predicated region
        $region17: #{tpu_custom_call.1} parent=15 // pred_check
          %p109 = pneg %p56
        $region18: #{tpu_custom_call.1} parent=15 // pred_check_branch
          %111 = sbr.rel (%p109) target = $region20
        $region19: #{tpu_custom_call.1} parent=15 // pred_region
          %s112 = sand.u32 %s46, 1
          %s113 = scalar_lea.sflag [#allocation6], %s112
          %s114 = sand.u32 %s46, 1
          %s115 = smul.addr %s114, 16
          %s116 = scalar_lea.vmem [#allocation5], %s115
          %s117 = smul.u32 2, %s30
          %s119 = ssub.s32 256, 256
          %120 = vsyncadd %s113, %s119
          %s121 = smul.addr %s29, 2
          %s122 = sadd.s32 %s117, %s121
          %s123 = smul.addr %s122, 128
          %s124 = scalar_lea.hbm %s2, %s123
          %s125 = sshll.u32 %s116, 4
          %s126 = int_to_ptr.vmem [resolvable:$true] %s125
          %131 = dma.hbm_to_vmem [thread:$0]  %s124, 256, %s126, %s113, 128, 128, 8
        $region20: #{tpu_custom_call.1} parent=15 // pred_fallthru
          _
      $region16: #{tpu_custom_call.1} parent=5 // pred_fallthru
        _
      %p132 = scmp.le.s32.totalorder 1, %s22
      %p133 = scmp.lt.s32.totalorder %s22, 3
      %p134 = pnand %p132, %p133
      %p135 = pneg %p134
      // Predicated region
      $region21: #{tpu_custom_call.1} parent=5 // pred_check
        _
      $region22: #{tpu_custom_call.1} parent=5 // pred_check_branch
        %137 = sbr.rel (%p134) target = $region24
      $region23: #{tpu_custom_call.1} parent=5 // pred_region
        %s138 = ssub.s32 %s22, 1
        %s139 = sand.u32 %s49, 1
        %s140 = scalar_lea.sflag [#allocation6], %s139
        %s141 = sand.u32 %s49, 1
        %s142 = smul.addr %s141, 16
        %s143 = scalar_lea.vmem [#allocation5], %s142
        // Predicated region
        $region25: #{tpu_custom_call.1} parent=23 // pred_check
          %p144 = pneg %p62
        $region26: #{tpu_custom_call.1} parent=23 // pred_check_branch
          %146 = sbr.rel (%p144) target = $region28
        $region27: #{tpu_custom_call.1} parent=23 // pred_region
          %147 = dma.done %s140, 256
        $region28: #{tpu_custom_call.1} parent=23 // pred_fallthru
          _
        %s148 = sand.u32 %s49, 1
        %s149 = scalar_lea.sflag [#allocation6], %s148
        %s150 = sand.u32 %s49, 1
        %s151 = smul.addr %s150, 16
        %s152 = scalar_lea.vmem [#allocation5], %s151
        %p153 = pneg %p62
        %p154 = pneg %p59
        %p155 = pneg %p90
        %p156 = pneg %p87
        %s157 = sand.u32 %s77, 1
        %s158 = scalar_lea.sflag [#allocation7], %s157
        %s159 = sand.u32 %s77, 1
        %s160 = smul.addr %s159, 16
        %s161 = scalar_lea.vmem [#allocation8], %s160
        %s162 = smul.u32 2, %s32
        %s163 = smul.u32 2, %s32
        %s164 = sld [smem:[#allocation4 + %s31]]
        %s165 = sld [smem:[#allocation3]]
        %s166 = sadd.s32 %s31, %s32
        %s167 = smul.u32 %s166, 2048
        %v168 = vlaneseq
        %v169 = vshrl.u32 %v168, 7
        %v170 = vlaneseq
        %v171 = vand.u32 %v170, 127
        %v172 = vmul.u32 %v169, 128
        %v173 = vadd.s32 %v172, %v171
        %v174 = vstv %s167
        %v175 = vadd.s32 %v174, %v173
        %v176 = vmul.u32 %v175, 2654435769
        %v177 = vstv %s165
        %v178 = vadd.s32 %v176, %v177
        %v179 = vshrl.u32 %v178, 16
        %v180 = vxor.u32 %v178, %v179
        %v181 = vmul.u32 %v180, 2146121005
        %v182 = vshrl.u32 %v181, 15
        %v183 = vxor.u32 %v181, %v182
        %v184 = vmul.u32 %v183, 2221713035
        %v185 = vshrl.u32 %v184, 16
        %v186 = vxor.u32 %v184, %v185
        %s187 = sadd.s32 %s167, 1024
        %v188 = vstv %s187
        %v189 = vadd.s32 %v188, %v173
        %v190 = vmul.u32 %v189, 2654435769
        %v191 = vadd.s32 %v190, %v177
        %v192 = vshrl.u32 %v191, 16
        %v193 = vxor.u32 %v191, %v192
        %v194 = vmul.u32 %v193, 2146121005
        %v195 = vshrl.u32 %v194, 15
        %v196 = vxor.u32 %v194, %v195
        %v197 = vmul.u32 %v196, 2221713035
        %v198 = vshrl.u32 %v197, 16
        %v199 = vxor.u32 %v197, %v198
        %v200 = vshrl.u32 %v186, 9
        %v201 = vor.u32 %v200, 1065353216
        %v203 = vsub.f32 2.0, %v201
        %v204 = vshrl.u32 %v199, 9
        %v205 = vor.u32 %v204, 1065353216
        %v207 = vsub.f32 %v205, 1.0
        %v208 = vmul.f32 %v207, 6.2831855
        %v209 = vlog2.pop %v203
        %v210 = vmul.f32 %v209, 0.6931472
        %v211 = vmul.f32 %v210, -2.0
        %v212 = vrsqrt.pop %v211
        %v213 = vmul.f32 %v211, %v212
        %vm214 = vcmp.eq.f32.partialorder %v211, inf
        %v215 = vsel %vm214, %v211, %v213
        %vm216 = vcmp.eq.f32.partialorder %v211, 0.0
        %v217 = vand.u32 %v211, 2147483648
        %v218 = vsel %vm216, %v217, %v215
        %v219 = vstv %s164
        %v220 = vmul.f32 %v218, %v219
        %v221 = vand.u32 2147483647, %v208
        %vm222 = vcmp.le.f32.partialorder %v221, 0.7853982
        %vm223 = vcmp.lt.s32.totalorder %v208, 0
        %v224 = vand.u32 %v208, 2139095040
        %v225 = vshrl.u32 %v224, 23
        %v226 = vsub.s32 %v225, 127
        %v227 = vand.u32 2147483647, %v208
        %v228 = vand.u32 %v227, 8388607
        %v229 = vor.u32 %v228, 8388608
        %v230 = vsub.s32 0, %v229
        %v231 = vadd.s32 %v226, 1
        %vm232 = vcmp.gt.s32.totalorder %v231, 0
        %v233 = vsel %vm232, %v231, 0
        %v234 = vshrl.u32 %v233, 5
        %v235 = vand.u32 %v233, 31
        %v236 = vsub.s32 32, %v235
        %v237 = vshrl.u32 683565275, %v236
        %v238 = vshll.u32 683565275, %v235
        %v239 = vshrl.u32 2475754826, %v236
        %v240 = vor.u32 %v238, %v239
        %v241 = vshll.u32 2475754826, %v235
        %v242 = vshrl.u32 2131351028, %v236
        %v243 = vor.u32 %v241, %v242
        %v244 = vshll.u32 2131351028, %v235
        %v245 = vshrl.u32 2102212464, %v236
        %v246 = vor.u32 %v244, %v245
        %v247 = vshll.u32 2102212464, %v235
        %v248 = vshrl.u32 920167782, %v236
        %v249 = vor.u32 %v247, %v248
        %v250 = vshll.u32 920167782, %v235
        %v251 = vshrl.u32 1326507024, %v236
        %v252 = vor.u32 %v250, %v251
        %vm253 = vcmp.lt.s32.totalorder %v234, 1
        %vm254 = vcmp.lt.s32.totalorder %v234, 2
        %vm255 = vcmp.lt.s32.totalorder %v234, 3
        %vm256 = vcmp.lt.s32.totalorder %v234, 4
        %v257 = vsel %vm253, %v237, %v240
        %v258 = vsel %vm256, %v246, 2102212464
        %v259 = vsel %vm255, %v243, %v258
        %v260 = vsel %vm254, %v257, %v259
        %v261 = vsel %vm253, %v240, %v243
        %v262 = vsel %vm256, %v249, 920167782
        %v263 = vsel %vm255, %v246, %v262
        %v264 = vsel %vm254, %v261, %v263
        %v265 = vsel %vm253, %v243, %v246
        %v266 = vsel %vm256, %v252, 1326507024
        %v267 = vsel %vm255, %v249, %v266
        %v268 = vsel %vm254, %v265, %v267
        %v269 = vshll.u32 %v229, 8
        %v270 = vmul.u32.u64.compose %v269, %v268
        %v271 = vextract.low.u32 %v270
        %v272 = vextract.high.u32 %v270
        %v273 = vmul.u32.u64.compose %v269, %v264
        %v274 = vextract.low.u32 %v273
        %v275 = vextract.high.u32 %v273
        %v276 = vmul.u32 %v269, %v260
        %v277 = vadd.s32 %v272, %v274
        %vm278 = vc.u32 %v272, %v274
        %v279 = vadd.s32 %v275, 1
        %v280 = vsel %vm278, %v279, %v275
        %v281 = vadd.s32 %v276, %v280
        %v282 = vadd.s32 %v281, 536870912
        %v283 = vshrl.u32 %v282, 30
        %v284 = vshll.u32 %v283, 30
        %v285 = vsub.s32 %v281, %v284
        %vm286 = vcmp.lt.s32.totalorder %v285, 0
        %v287 = vsub.s32 0, %v285
        %v288 = vsel %vm286, %v287, %v285
        %v289 = vclz %v288
        %v290 = vsub.s32 %v289, 2
        %vm291 = vcmp.gt.s32.totalorder 0, %v290
        %v292 = vsel %vm291, 0, %v290
        %v293 = vsub.s32 32, %v292
        %v294 = vshll.u32 %v285, %v292
        %v295 = vshrl.u32 %v277, %v293
        %v296 = vor.u32 %v294, %v295
        %v297 = vsub.s32 4294967266, %v292
        %v298 = vadd.s32 %v297, 127
        %v299 = vshll.u32 %v298, 23
        %v300 = vor.u32 4788187, %v299
        %v301 = vand.u32 2147483647, %v300
        %v303 = vcvt.s32.f32 %v296
        %v304 = vmul.f32 %v303, %v301
        %v305 = vxor.u32 %v304, 2147483648
        %v306 = vsel %vm223, %v305, %v304
        %v307 = vsub.s32 4, %v283
        %v308 = vsel %vm223, %v307, %v283
        %v309 = vsel %vm222, %v208, %v306
        %v310 = vsel %vm222, 0, %v308
        %v311 = vcosq.f32.pop %v309
        %v312 = vsinq.f32.pop %v309
        %vm313 = vweird.f32 %v208
        %v314 = vand.u32 %v310, 3
        %vm315 = vcmp.lt.s32.totalorder %v314, 2
        %vm316 = vcmp.eq.s32.totalorder %v314, 0
        %v317 = vxor.u32 %v312, 2147483648
        %v318 = vsel %vm316, %v311, %v317
        %vm319 = vcmp.eq.s32.totalorder %v314, 2
        %v320 = vxor.u32 %v311, 2147483648
        %v321 = vsel %vm319, %v320, %v312
        %v322 = vsel %vm315, %v318, %v321
        %v323 = vsel %vm313, nan, %v322
        %v324 = vmul.f32 %v220, %v323
        %v325 = vand.u32 2147483647, %v208
        %vm326 = vcmp.le.f32.partialorder %v325, 0.7853982
        %vm327 = vcmp.lt.s32.totalorder %v208, 0
        %v328 = vand.u32 %v208, 2139095040
        %v329 = vshrl.u32 %v328, 23
        %v330 = vsub.s32 %v329, 127
        %v331 = vand.u32 2147483647, %v208
        %v332 = vand.u32 %v331, 8388607
        %v333 = vor.u32 %v332, 8388608
        %v334 = vsub.s32 0, %v333
        %v335 = vadd.s32 %v330, 1
        %vm336 = vcmp.gt.s32.totalorder %v335, 0
        %v337 = vsel %vm336, %v335, 0
        %v338 = vshrl.u32 %v337, 5
        %v339 = vand.u32 %v337, 31
        %v340 = vsub.s32 32, %v339
        %v341 = vshrl.u32 683565275, %v340
        %v342 = vshll.u32 683565275, %v339
        %v343 = vshrl.u32 2475754826, %v340
        %v344 = vor.u32 %v342, %v343
        %v345 = vshll.u32 2475754826, %v339
        %v346 = vshrl.u32 2131351028, %v340
        %v347 = vor.u32 %v345, %v346
        %v348 = vshll.u32 2131351028, %v339
        %v349 = vshrl.u32 2102212464, %v340
        %v350 = vor.u32 %v348, %v349
        %v351 = vshll.u32 2102212464, %v339
        %v352 = vshrl.u32 920167782, %v340
        %v353 = vor.u32 %v351, %v352
        %v354 = vshll.u32 920167782, %v339
        %v355 = vshrl.u32 1326507024, %v340
        %v356 = vor.u32 %v354, %v355
        %vm357 = vcmp.lt.s32.totalorder %v338, 1
        %vm358 = vcmp.lt.s32.totalorder %v338, 2
        %vm359 = vcmp.lt.s32.totalorder %v338, 3
        %vm360 = vcmp.lt.s32.totalorder %v338, 4
        %v361 = vsel %vm357, %v341, %v344
        %v362 = vsel %vm360, %v350, 2102212464
        %v363 = vsel %vm359, %v347, %v362
        %v364 = vsel %vm358, %v361, %v363
        %v365 = vsel %vm357, %v344, %v347
        %v366 = vsel %vm360, %v353, 920167782
        %v367 = vsel %vm359, %v350, %v366
        %v368 = vsel %vm358, %v365, %v367
        %v369 = vsel %vm357, %v347, %v350
        %v370 = vsel %vm360, %v356, 1326507024
        %v371 = vsel %vm359, %v353, %v370
        %v372 = vsel %vm358, %v369, %v371
        %v373 = vshll.u32 %v333, 8
        %v374 = vmul.u32.u64.compose %v373, %v372
        %v375 = vextract.low.u32 %v374
        %v376 = vextract.high.u32 %v374
        %v377 = vmul.u32.u64.compose %v373, %v368
        %v378 = vextract.low.u32 %v377
        %v379 = vextract.high.u32 %v377
        %v380 = vmul.u32 %v373, %v364
        %v381 = vadd.s32 %v376, %v378
        %vm382 = vc.u32 %v376, %v378
        %v383 = vadd.s32 %v379, 1
        %v384 = vsel %vm382, %v383, %v379
        %v385 = vadd.s32 %v380, %v384
        %v386 = vadd.s32 %v385, 536870912
        %v387 = vshrl.u32 %v386, 30
        %v388 = vshll.u32 %v387, 30
        %v389 = vsub.s32 %v385, %v388
        %vm390 = vcmp.lt.s32.totalorder %v389, 0
        %v391 = vsub.s32 0, %v389
        %v392 = vsel %vm390, %v391, %v389
        %v393 = vclz %v392
        %v394 = vsub.s32 %v393, 2
        %vm395 = vcmp.gt.s32.totalorder 0, %v394
        %v396 = vsel %vm395, 0, %v394
        %v397 = vsub.s32 32, %v396
        %v398 = vshll.u32 %v389, %v396
        %v399 = vshrl.u32 %v381, %v397
        %v400 = vor.u32 %v398, %v399
        %v401 = vsub.s32 4294967266, %v396
        %v402 = vadd.s32 %v401, 127
        %v403 = vshll.u32 %v402, 23
        %v404 = vor.u32 4788187, %v403
        %v405 = vand.u32 2147483647, %v404
        %v407 = vcvt.s32.f32 %v400
        %v408 = vmul.f32 %v407, %v405
        %v409 = vxor.u32 %v408, 2147483648
        %v410 = vsel %vm327, %v409, %v408
        %v411 = vsub.s32 4, %v387
        %v412 = vsel %vm327, %v411, %v387
        %v413 = vsel %vm326, %v208, %v410
        %v414 = vsel %vm326, 0, %v412
        %v415 = vcosq.f32.pop %v413
        %v416 = vsinq.f32.pop %v413
        %vm417 = vweird.f32 %v208
        %v418 = vadd.s32 %v414, 3
        %v419 = vand.u32 %v418, 3
        %vm420 = vcmp.lt.s32.totalorder %v419, 2
        %vm421 = vcmp.eq.s32.totalorder %v419, 0
        %v422 = vxor.u32 %v416, 2147483648
        %v423 = vsel %vm421, %v415, %v422
        %vm424 = vcmp.eq.s32.totalorder %v419, 2
        %v425 = vxor.u32 %v415, 2147483648
        %v426 = vsel %vm424, %v425, %v416
        %v427 = vsel %vm420, %v423, %v426
        %v428 = vsel %vm417, nan, %v427
        %v429 = vmul.f32 %v220, %v428
        %v430 = vld [vmem:[%s143] sm:$0xff]
        %v431 = vadd.f32 %v430, %v324
        %432 = vst [vmem:[%s161] sm:$0xff] %v431
        %v433 = vld [vmem:[%s143 + $0x8] sm:$0xff]
        %v434 = vadd.f32 %v433, %v429
        %435 = vst [vmem:[%s161 + $0x8] sm:$0xff] %v434
        %s436 = sand.u32 %s77, 1
        %s437 = scalar_lea.sflag [#allocation7], %s436
        %s438 = sand.u32 %s77, 1
        %s439 = smul.addr %s438, 16
        %s440 = scalar_lea.vmem [#allocation8], %s439
        // Predicated region
        $region29: #{tpu_custom_call.1} parent=23 // pred_check
          %p441 = pneg %p87
        $region30: #{tpu_custom_call.1} parent=23 // pred_check_branch
          %443 = sbr.rel (%p441) target = $region32
        $region31: #{tpu_custom_call.1} parent=23 // pred_region
          %s444 = smul.u32 2, %s32
          %s446 = ssub.s32 256, 256
          %447 = vsyncadd %s437, %s446
          %s448 = smul.addr %s31, 2
          %s449 = sadd.s32 %s444, %s448
          %s450 = smul.addr %s449, 128
          %s451 = scalar_lea.hbm %s3, %s450
          %s452 = sshll.u32 %s440, 4
          %s453 = int_to_ptr.vmem [resolvable:$true] %s452
          %458 = dma.vmem_to_hbm [thread:$0]  %s453, 256, %s451, %s437, 128, 128, 8
        $region32: #{tpu_custom_call.1} parent=23 // pred_fallthru
          _
      $region24: #{tpu_custom_call.1} parent=5 // pred_fallthru
        _
      %p459 = scmp.le.s32.totalorder 2, %s22
      // Predicated region
      $region33: #{tpu_custom_call.1} parent=5 // pred_check
        %p460 = pneg %p459
      $region34: #{tpu_custom_call.1} parent=5 // pred_check_branch
        %462 = sbr.rel (%p460) target = $region36
      $region35: #{tpu_custom_call.1} parent=5 // pred_region
        %s463 = ssub.s32 %s22, 2
        // Predicated region
        $region37: #{tpu_custom_call.1} parent=35 // pred_check
          %p464 = pneg %p93
        $region38: #{tpu_custom_call.1} parent=35 // pred_check_branch
          %466 = sbr.rel (%p464) target = $region40
        $region39: #{tpu_custom_call.1} parent=35 // pred_region
          %s467 = sand.u32 %s78, 1
          %s468 = scalar_lea.sflag [#allocation7], %s467
          %s469 = sand.u32 %s78, 1
          %s470 = smul.addr %s469, 16
          %s471 = scalar_lea.vmem [#allocation8], %s470
          %472 = dma.done %s468, 256
        $region40: #{tpu_custom_call.1} parent=35 // pred_fallthru
          _
      $region36: #{tpu_custom_call.1} parent=5 // pred_fallthru
        _
    $region6: #{tpu_custom_call.1} parent=1 // loop_footer
      %s26 = sadd.s32 1, %s22
    $region7: #{tpu_custom_call.1} parent=1 // loop_footer_branch
      %21 = sbr.rel target = $region3
    $region8: #{tpu_custom_call.1} parent=1 // loop_exit
      _
    %473 = vsyncpa [#allocation6], 1
    %s474 = scalar_lea.sflag [#allocation6], 1
    %475 = vsyncpa %s474, 1
    %476 = vsyncpa [#allocation7], 1
    %s477 = scalar_lea.sflag [#allocation7], 1
    %478 = vsyncpa %s477, 1

</llo_original>
